<compile_context>
chip_gen: v7x
topology: tpu7x:2x2x1
jax: 0.10.0
libtpu: 0.0.40
codegen_flags: <defaults>
</compile_context>

<pallas_src>
import jax
import jax.numpy as jnp
import numpy as np
from jax.experimental import pallas as pl
from jax.experimental.pallas import tpu as pltpu

B_PAD = 8  # pad batch to one sublane group


def _param_layout(I, H):
    """Row offsets of each parameter inside the packed (rows, H) f32 slab."""
    r_whh = 0                               # (H, H)  = W_hh^T
    r_wih = H                               # (I, H)  = W_ih^T
    r_brnn = H + I                          # (1, H)  = b_ih + b_hh
    r_w1 = ((H + I + 1 + 7) // 8) * 8       # (H, H)  = W1^T lane-padded F1 -> H
    r_b1 = r_w1 + H                         # (1, H)  = b1 lane-padded
    r_w2 = r_b1 + 1                         # (1, H)  = W2 row lane-padded
    r_b2 = r_w2 + 1                         # scalar at [r_b2, 0]
    rows = ((r_b2 + 1 + 7) // 8) * 8
    return r_whh, r_wih, r_brnn, r_w1, r_b1, r_w2, r_b2, rows


def pack_params(w_ih, w_hh, b_ih, b_hh, w1, b1, w2, b2):
    """Pack all weights/biases (PyTorch layouts) into one lane-padded f32 slab.

    Done once on the host; the per-call path then DMAs a single contiguous
    (rows, H) array instead of 6 tiny ones.
    """
    H, I = w_ih.shape
    F1 = w1.shape[0]
    assert F1 <= H and w2.shape == (1, F1) and b2.shape == (1,)
    r_whh, r_wih, r_brnn, r_w1, r_b1, r_w2, r_b2, rows = _param_layout(I, H)
    P = np.zeros((rows, H), np.float32)
    P[r_whh:r_whh + H, :] = np.asarray(w_hh).T          # h @ slab == h @ W_hh^T
    P[r_wih:r_wih + I, :] = np.asarray(w_ih).T          # x @ slab == x @ W_ih^T
    P[r_brnn, :] = np.asarray(b_ih) + np.asarray(b_hh)  # folded RNN biases
    P[r_w1:r_w1 + H, :F1] = np.asarray(w1).T            # fc1 weight (padded cols = 0)
    P[r_b1, :F1] = np.asarray(b1)                       # fc1 bias   (padded cols = 0)
    P[r_w2, :F1] = np.asarray(w2)[0]                    # fc2 weight as a row
    P[r_b2, 0] = np.asarray(b2)[0]                      # fc2 bias scalar
    return jnp.asarray(P)


def rnn_kernel(x_ref, p_ref, out_ref):
    # x_ref: (T*B_PAD, I) time-major (rows [t*8:(t+1)*8] are time step t, batch-padded)
    # p_ref: (rows, H) packed parameter slab
    # out_ref: (B, 1) real (unpadded) batch
    TB, I = x_ref.shape
    H = p_ref.shape[1]
    Bp = B_PAD
    T = TB // Bp
    B = out_ref.shape[0]

    r_whh, r_wih, r_brnn, r_w1, r_b1, r_w2, r_b2, _ = _param_layout(I, H)
    whh = p_ref[r_whh:r_whh + H, :]            # (H, H)
    wih = p_ref[r_wih:r_wih + I, :]            # (I, H)
    brnn = p_ref[r_brnn:r_brnn + 1, :]         # (1, H)
    w1 = p_ref[r_w1:r_w1 + H, :]               # (H, H), cols >= F1 are zero
    b1 = p_ref[r_b1:r_b1 + 1, :]               # (1, H), cols >= F1 are zero
    w2r = p_ref[r_w2:r_w2 + 1, :]              # (1, H), cols >= F1 are zero
    b2 = p_ref[r_b2:r_b2 + 1, 0:1]             # (1, 1)

    # Hoisted input projection (one MXU matmul, off the serial dependence chain).
    # xproj[t*8:(t+1)*8, :] == x_t @ W_ih^T + (b_ih + b_hh)
    xproj = jnp.dot(x_ref[...], wih, preferred_element_type=jnp.float32) + brnn

    # Recurrence: h_t = tanh(xproj_t + h_{t-1} @ W_hh^T).  h_0 = 0, so the first
    # step needs no matmul.  T is a static Python int -> fully unrolled, static
    # sublane-aligned slices.
    h = jnp.tanh(xproj[0:Bp, :])
    for t in range(1, T):
        h = jnp.tanh(xproj[t * Bp:(t + 1) * Bp, :]
                     + jnp.dot(h, whh, preferred_element_type=jnp.float32))

    # Fused MLP head on h_T (== rnn_output[:, -1, :]).  fc1 is lane-padded to H
    # (padded lanes give tanh(0) = 0); fc2 is an elementwise-mul + lane reduction
    # against the padded weight row (padded lanes contribute 0).
    z1 = jnp.tanh(jnp.dot(h, w1, preferred_element_type=jnp.float32) + b1)   # (Bp, H)
    y = jnp.sum(z1 * w2r, axis=-1, keepdims=True) + b2                       # (Bp, 1)
    out_ref[...] = y[0:B, :]   # drop the padded batch rows; single masked store


@jax.jit
def simple_rnn_forward(x, params):
    B, T, I = x.shape
    # Single small fused pre-op: pad batch to one sublane group and lay out
    # time-major so every per-step slice inside the kernel is an aligned (8, H)
    # window.  (The padding itself forces one wrapper op; transpose+pad+reshape
    # fuse into that same op under jit.)
    x_p = jnp.pad(x, ((0, B_PAD - B), (0, 0), (0, 0)))                # (8, T, I)
    x_flat = jnp.transpose(x_p, (1, 0, 2)).reshape(T * B_PAD, I)      # (T*8, I)

    vmem = pl.BlockSpec(memory_space=pltpu.MemorySpace.VMEM)
    return pl.pallas_call(
        rnn_kernel,
        out_shape=jax.ShapeDtypeStruct((B, 1), jnp.float32),
        # Single invocation, no grid: 2 input DMAs (activations + packed params),
        # everything resident in VMEM for the whole recurrence.
        in_specs=[vmem, vmem],
        out_specs=vmem,
    )(x_flat, params)


def reference_forward(x, w_ih, w_hh, b_ih, b_hh, w1, b1, w2, b2):
    """Pure-JAX reference with PyTorch nn.RNN(batch_first) + fc1 + tanh + fc2 semantics."""
    B, T, _ = x.shape
    H = w_hh.shape[0]
    hp = jax.lax.Precision.HIGHEST
    h = jnp.zeros((B, H), jnp.float32)
    for t in range(T):
        h = jnp.tanh(jnp.dot(x[:, t, :], w_ih.T, precision=hp)
                     + jnp.dot(h, w_hh.T, precision=hp) + b_ih + b_hh)
    z1 = jnp.tanh(jnp.dot(h, w1.T, precision=hp) + b1)
    return jnp.dot(z1, w2.T, precision=hp) + b2


if __name__ == "__main__":
    # Small shapes consistent with the module: batch=2, seq=8, input=4, hidden=32.
    B, T, I, H = 2, 8, 4, 32
    F1, F2 = 20, 1

    key = jax.random.PRNGKey(0)
    ks = jax.random.split(key, 9)

    # nn.RNN weights: uniform(-0.1, 0.1) per the module's __init__.
    w_ih = jax.random.uniform(ks[0], (H, I), jnp.float32, -0.1, 0.1)
    w_hh = jax.random.uniform(ks[1], (H, H), jnp.float32, -0.1, 0.1)
    # RNN biases + fc1: PyTorch default init uniform(-1/sqrt(fan_in), 1/sqrt(fan_in)).
    s = 1.0 / np.sqrt(H)
    b_ih = jax.random.uniform(ks[2], (H,), jnp.float32, -s, s)
    b_hh = jax.random.uniform(ks[3], (H,), jnp.float32, -s, s)
    w1 = jax.random.uniform(ks[4], (F1, H), jnp.float32, -s, s)
    b1 = jax.random.uniform(ks[5], (F1,), jnp.float32, -s, s)
    s2 = 1.0 / np.sqrt(F1)
    w2 = jax.random.uniform(ks[6], (F2, F1), jnp.float32, -s2, s2)
    b2 = jax.random.uniform(ks[7], (F2,), jnp.float32, -s2, s2)

    x = jax.random.normal(ks[8], (B, T, I), jnp.float32)

    params = pack_params(w_ih, w_hh, b_ih, b_hh, w1, b1, w2, b2)

    out = jax.block_until_ready(simple_rnn_forward(x, params))
    ref = reference_forward(x, w_ih, w_hh, b_ih, b_hh, w1, b1, w2, b2)

    assert out.shape == (B, F2)
    # f32 everywhere; tolerance allows for MXU f32-emulation vs XLA HIGHEST ulp
    # differences accumulated over the 8-step tanh recurrence.
    assert np.allclose(np.asarray(out), np.asarray(ref), atol=1e-4, rtol=1e-3), (
        float(np.max(np.abs(np.asarray(out) - np.asarray(ref)))))

    print("KERNEL_OK")
</pallas_src>

<mosaic_0001>
module attributes {stable_mosaic.version = 11 : i64} {
  func.func @rnn_kernel(%arg0: memref<64x4xf32, #tpu.memory_space<vmem>>, %arg1: memref<80x32xf32, #tpu.memory_space<vmem>>, %arg2: memref<2x1xf32, #tpu.memory_space<vmem>>) attributes {dimension_semantics = [], scalar_prefetch = 0 : i64, scratch_operands = 0 : i64, tpu.core_type = #tpu.core_type<tc>} {
    %c0 = arith.constant 0 : index
    %c0_0 = arith.constant 0 : index
    %0 = vector.load %arg1[%c0, %c0_0] : memref<80x32xf32, #tpu.memory_space<vmem>>, vector<32x32xf32>
    %c32 = arith.constant 32 : index
    %c0_1 = arith.constant 0 : index
    %1 = vector.load %arg1[%c32, %c0_1] : memref<80x32xf32, #tpu.memory_space<vmem>>, vector<4x32xf32>
    %c36 = arith.constant 36 : index
    %c0_2 = arith.constant 0 : index
    %2 = vector.load %arg1[%c36, %c0_2] : memref<80x32xf32, #tpu.memory_space<vmem>>, vector<1x32xf32>
    %c40 = arith.constant 40 : index
    %c0_3 = arith.constant 0 : index
    %3 = vector.load %arg1[%c40, %c0_3] : memref<80x32xf32, #tpu.memory_space<vmem>>, vector<32x32xf32>
    %c72 = arith.constant 72 : index
    %c0_4 = arith.constant 0 : index
    %4 = vector.load %arg1[%c72, %c0_4] : memref<80x32xf32, #tpu.memory_space<vmem>>, vector<1x32xf32>
    %c73 = arith.constant 73 : index
    %c0_5 = arith.constant 0 : index
    %5 = vector.load %arg1[%c73, %c0_5] : memref<80x32xf32, #tpu.memory_space<vmem>>, vector<1x32xf32>
    %c74 = arith.constant 74 : index
    %c0_6 = arith.constant 0 : index
    %6 = vector.load %arg1[%c74, %c0_6] : memref<80x32xf32, #tpu.memory_space<vmem>>, vector<1x1xf32>
    %c0_7 = arith.constant 0 : index
    %c0_8 = arith.constant 0 : index
    %7 = vector.load %arg0[%c0_7, %c0_8] : memref<64x4xf32, #tpu.memory_space<vmem>>, vector<64x4xf32>
    %cst = arith.constant dense<0.000000e+00> : vector<64x32xf32>
    %8 = tpu.matmul %7, %1, %cst {dimension_numbers = #tpu.dot_dimension_numbers<[1], [0], [0], [1], [0, 0, 1, 1], [], []>} : vector<64x4xf32>, vector<4x32xf32>, vector<64x32xf32> -> vector<64x32xf32>
    %9 = vector.broadcast %2 : vector<1x32xf32> to vector<64x32xf32>
    %10 = arith.addf %8, %9 : vector<64x32xf32>
    %11 = vector.extract_strided_slice %10 {offsets = [0, 0], sizes = [8, 32], strides = [1, 1]} : vector<64x32xf32> to vector<8x32xf32>
    %12 = math.tanh %11 : vector<8x32xf32>
    %13 = vector.extract_strided_slice %10 {offsets = [8, 0], sizes = [8, 32], strides = [1, 1]} : vector<64x32xf32> to vector<8x32xf32>
    %cst_9 = arith.constant dense<0.000000e+00> : vector<8x32xf32>
    %14 = tpu.matmul %12, %0, %cst_9 {dimension_numbers = #tpu.dot_dimension_numbers<[1], [0], [0], [1], [0, 0, 1, 1], [], []>} : vector<8x32xf32>, vector<32x32xf32>, vector<8x32xf32> -> vector<8x32xf32>
    %15 = arith.addf %13, %14 : vector<8x32xf32>
    %16 = math.tanh %15 : vector<8x32xf32>
    %17 = vector.extract_strided_slice %10 {offsets = [16, 0], sizes = [8, 32], strides = [1, 1]} : vector<64x32xf32> to vector<8x32xf32>
    %cst_10 = arith.constant dense<0.000000e+00> : vector<8x32xf32>
    %18 = tpu.matmul %16, %0, %cst_10 {dimension_numbers = #tpu.dot_dimension_numbers<[1], [0], [0], [1], [0, 0, 1, 1], [], []>} : vector<8x32xf32>, vector<32x32xf32>, vector<8x32xf32> -> vector<8x32xf32>
    %19 = arith.addf %17, %18 : vector<8x32xf32>
    %20 = math.tanh %19 : vector<8x32xf32>
    %21 = vector.extract_strided_slice %10 {offsets = [24, 0], sizes = [8, 32], strides = [1, 1]} : vector<64x32xf32> to vector<8x32xf32>
    %cst_11 = arith.constant dense<0.000000e+00> : vector<8x32xf32>
    %22 = tpu.matmul %20, %0, %cst_11 {dimension_numbers = #tpu.dot_dimension_numbers<[1], [0], [0], [1], [0, 0, 1, 1], [], []>} : vector<8x32xf32>, vector<32x32xf32>, vector<8x32xf32> -> vector<8x32xf32>
    %23 = arith.addf %21, %22 : vector<8x32xf32>
    %24 = math.tanh %23 : vector<8x32xf32>
    %25 = vector.extract_strided_slice %10 {offsets = [32, 0], sizes = [8, 32], strides = [1, 1]} : vector<64x32xf32> to vector<8x32xf32>
    %cst_12 = arith.constant dense<0.000000e+00> : vector<8x32xf32>
    %26 = tpu.matmul %24, %0, %cst_12 {dimension_numbers = #tpu.dot_dimension_numbers<[1], [0], [0], [1], [0, 0, 1, 1], [], []>} : vector<8x32xf32>, vector<32x32xf32>, vector<8x32xf32> -> vector<8x32xf32>
    %27 = arith.addf %25, %26 : vector<8x32xf32>
    %28 = math.tanh %27 : vector<8x32xf32>
    %29 = vector.extract_strided_slice %10 {offsets = [40, 0], sizes = [8, 32], strides = [1, 1]} : vector<64x32xf32> to vector<8x32xf32>
    %cst_13 = arith.constant dense<0.000000e+00> : vector<8x32xf32>
    %30 = tpu.matmul %28, %0, %cst_13 {dimension_numbers = #tpu.dot_dimension_numbers<[1], [0], [0], [1], [0, 0, 1, 1], [], []>} : vector<8x32xf32>, vector<32x32xf32>, vector<8x32xf32> -> vector<8x32xf32>
    %31 = arith.addf %29, %30 : vector<8x32xf32>
    %32 = math.tanh %31 : vector<8x32xf32>
    %33 = vector.extract_strided_slice %10 {offsets = [48, 0], sizes = [8, 32], strides = [1, 1]} : vector<64x32xf32> to vector<8x32xf32>
    %cst_14 = arith.constant dense<0.000000e+00> : vector<8x32xf32>
    %34 = tpu.matmul %32, %0, %cst_14 {dimension_numbers = #tpu.dot_dimension_numbers<[1], [0], [0], [1], [0, 0, 1, 1], [], []>} : vector<8x32xf32>, vector<32x32xf32>, vector<8x32xf32> -> vector<8x32xf32>
    %35 = arith.addf %33, %34 : vector<8x32xf32>
    %36 = math.tanh %35 : vector<8x32xf32>
    %37 = vector.extract_strided_slice %10 {offsets = [56, 0], sizes = [8, 32], strides = [1, 1]} : vector<64x32xf32> to vector<8x32xf32>
    %cst_15 = arith.constant dense<0.000000e+00> : vector<8x32xf32>
    %38 = tpu.matmul %36, %0, %cst_15 {dimension_numbers = #tpu.dot_dimension_numbers<[1], [0], [0], [1], [0, 0, 1, 1], [], []>} : vector<8x32xf32>, vector<32x32xf32>, vector<8x32xf32> -> vector<8x32xf32>
    %39 = arith.addf %37, %38 : vector<8x32xf32>
    %40 = math.tanh %39 : vector<8x32xf32>
    %cst_16 = arith.constant dense<0.000000e+00> : vector<8x32xf32>
    %41 = tpu.matmul %40, %3, %cst_16 {dimension_numbers = #tpu.dot_dimension_numbers<[1], [0], [0], [1], [0, 0, 1, 1], [], []>} : vector<8x32xf32>, vector<32x32xf32>, vector<8x32xf32> -> vector<8x32xf32>
    %42 = vector.broadcast %4 : vector<1x32xf32> to vector<8x32xf32>
    %43 = arith.addf %41, %42 : vector<8x32xf32>
    %44 = math.tanh %43 : vector<8x32xf32>
    %45 = vector.broadcast %5 : vector<1x32xf32> to vector<8x32xf32>
    %46 = arith.mulf %44, %45 : vector<8x32xf32>
    %cst_17 = arith.constant dense<0.000000e+00> : vector<8xf32>
    %47 = vector.multi_reduction <add>, %46, %cst_17 [1] : vector<8x32xf32> to vector<8xf32>
    %48 = vector.shape_cast %47 : vector<8xf32> to vector<8x1xf32>
    %49 = vector.broadcast %6 : vector<1x1xf32> to vector<8x1xf32>
    %50 = arith.addf %48, %49 : vector<8x1xf32>
    %51 = vector.extract_strided_slice %50 {offsets = [0, 0], sizes = [2, 1], strides = [1, 1]} : vector<8x1xf32> to vector<2x1xf32>
    %c0_18 = arith.constant 0 : index
    %c0_19 = arith.constant 0 : index
    %52 = vector.load %arg2[%c0_18, %c0_19] : memref<2x1xf32, #tpu.memory_space<vmem>>, vector<2x1xf32>
    tpu.vector_store %arg2[%c0_18, %c0_19], %51 {strides = array<i32>} : memref<2x1xf32, #tpu.memory_space<vmem>>, vector<2x1xf32>,
    return
  }
}

</mosaic_0001>

<llo_original>
// kernel: simple_rnn_forward.1
$region0: #{simple_rnn_forward.1}
  #allocation0 [shape = 'u32[]', space=smem, size = 0x4, offset = 0x4, fixed_abs, tag = 'smem constant byte address 0x4 - core index']
  #allocation1 [shape = 'u32[144,128]{1,0:T(1,128)}', space=vmem, size = 0x12000, scoped, tag = 'internal scratch']
  %s0 = inlined_call_operand.vmem [shape: f32[64,4], index: 0, kind: input, shape index: {}]
  %s1 = inlined_call_operand.vmem [shape: f32[80,32], index: 1, kind: input, shape index: {}]
  %s2 = inlined_call_operand.vmem [shape: f32[2,1], index: 2, kind: output, shape index: {}]
  %s3 = sld [smem:[#allocation0]]
  $region18: #{simple_rnn_forward.1} parent=0
    _
  %s5 = ssub.s32 1, %s3
  %s6 = scalar_select 0, %s5, %s3
  // Predicated region
  $region2: #{simple_rnn_forward.1} parent=0 // pred_check
    _
  $region3: #{simple_rnn_forward.1} parent=0 // pred_check_branch
    %8 = sbr.rel (0) target = $region5
  $region4: #{simple_rnn_forward.1} parent=0 // pred_region
    _
  $region5: #{simple_rnn_forward.1} parent=0 // pred_fallthru
    _
  // Predicated region
  $region6: #{simple_rnn_forward.1} parent=0 // pred_check
    _
  $region7: #{simple_rnn_forward.1} parent=0 // pred_check_branch
    %10 = sbr.rel (0) target = $region9
  $region8: #{simple_rnn_forward.1} parent=0 // pred_region
    _
  $region9: #{simple_rnn_forward.1} parent=0 // pred_fallthru
    _
  %v11 = vld [vmem:[%s1] sm:$0xff]
  %v12 = vld [vmem:[%s1 + $0x8] sm:$0xff]
  %v13 = vld [vmem:[%s1 + $0x10] sm:$0xff]
  %v14 = vld [vmem:[%s1 + $0x18] sm:$0xff]
  %v15 = vld [vmem:[%s1 + $0x20] sm:$0xf]
  %v16 = vld [vmem:[%s1 + $0x24] sm:$0x1]
  %v17 = vld [vmem:[%s1 + $0x28] sm:$0xff]
  %v18 = vld [vmem:[%s1 + $0x30] sm:$0xff]
  %v19 = vld [vmem:[%s1 + $0x38] sm:$0xff]
  %v20 = vld [vmem:[%s1 + $0x40] sm:$0xff]
  %v21 = vld [vmem:[%s1 + $0x48] sm:$0x1]
  %v22 = vld [vmem:[%s1 + $0x49] sm:$0x1]
  %v23 = vld [vmem:[%s1 + $0x4a] sm:$0x1]
  %v24 = vld [vmem:[%s0] sm:$0xff]
  %v25 = vld [vmem:[%s0 + $0x8] sm:$0xff]
  %v26 = vld [vmem:[%s0 + $0x10] sm:$0xff]
  %v27 = vld [vmem:[%s0 + $0x18] sm:$0xff]
  %v28 = vld [vmem:[%s0 + $0x20] sm:$0xff]
  %v29 = vld [vmem:[%s0 + $0x28] sm:$0xff]
  %v30 = vld [vmem:[%s0 + $0x30] sm:$0xff]
  %v31 = vld [vmem:[%s0 + $0x38] sm:$0xff]
  %v32 = vlaneseq
  %v33 = vshrl.u32 %v32, 7
  %v34 = vsub.s32 0, %v33
  %v35 = vrot.slane %v16, %v34
  %vm36 = vcmask 31744
  %v38 = vsel %vm36, %v24, 0
  %v41 = vsel %vm36, %v25, 0
  %v44 = vsel %vm36, %v26, 0
  %v47 = vsel %vm36, %v27, 0
  %v50 = vsel %vm36, %v28, 0
  %v53 = vsel %vm36, %v29, 0
  %v56 = vsel %vm36, %v30, 0
  %v59 = vsel %vm36, %v31, 0
  %vm61 = vcmask 1043456
  %v63 = vsel %vm61, %v15, 0
  %65 = vmatprep.subr.mxu0 0.0
  %66 = vmatpush1.msra.mxu0 %v63
  %67 = vmatprep.subr.mxu0 0.0
  %68 = vmatpush1.msra.mxu0 0.0
  %69 = vmatprep.subr.mxu0 0.0
  %70 = vmatpush1.msra.mxu0 0.0
  %71 = vmatprep.subr.mxu0 0.0
  %72 = vmatpush1.msra.mxu0 0.0
  %73 = vmatprep.subr.mxu0 0.0
  %74 = vmatpush1.msra.mxu0 0.0
  %75 = vmatprep.subr.mxu0 0.0
  %76 = vmatpush1.msra.mxu0 0.0
  %77 = vmatprep.subr.mxu0 0.0
  %78 = vmatpush1.msra.mxu0 0.0
  %79 = vmatprep.subr.mxu0 0.0
  %80 = vmatpush1.msra.mxu0 0.0
  %81 = vmatprep.subr.mxu0 0.0
  %82 = vmatpush1.msra.mxu0 0.0
  %83 = vmatprep.subr.mxu0 0.0
  %84 = vmatpush1.msra.mxu0 0.0
  %85 = vmatprep.subr.mxu0 0.0
  %86 = vmatpush1.msra.mxu0 0.0
  %87 = vmatprep.subr.mxu0 0.0
  %88 = vmatpush1.msra.mxu0 0.0
  %89 = vmatprep.subr.mxu0 0.0
  %90 = vmatpush1.msra.mxu0 0.0
  %91 = vmatprep.subr.mxu0 0.0
  %92 = vmatpush1.msra.mxu0 0.0
  %93 = vmatprep.subr.mxu0 0.0
  %94 = vmatpush1.msra.mxu0 0.0
  %95 = vmatprep.subr.mxu0 0.0
  %96 = vmatpush1.msra.mxu0 0.0
  %97 = vmatprep.subr.mxu0 0.0
  %98 = vmatpush1.msra.mxu0 0.0
  %99 = vmatprep.subr.mxu0 0.0
  %100 = vmatpush1.msra.mxu0 0.0
  %101 = vmatprep.subr.mxu0 0.0
  %102 = vmatpush1.msra.mxu0 0.0
  %103 = vmatprep.subr.mxu0 0.0
  %104 = vmatpush1.msra.mxu0 0.0
  %105 = vmatprep.subr.mxu0 0.0
  %106 = vmatpush1.msra.mxu0 0.0
  %107 = vmatprep.subr.mxu0 0.0
  %108 = vmatpush1.msra.mxu0 0.0
  %109 = vmatprep.subr.mxu0 0.0
  %110 = vmatpush1.msra.mxu0 0.0
  %111 = vmatprep.subr.mxu0 0.0
  %112 = vmatpush1.msra.mxu0 0.0
  %113 = vmatprep.subr.mxu0 0.0
  %114 = vmatpush1.msra.mxu0 0.0
  %115 = vmatprep.subr.mxu0 0.0
  %116 = vmatpush1.msra.mxu0 0.0
  %117 = vmatprep.subr.mxu0 0.0
  %118 = vmatpush1.msra.mxu0 0.0
  %119 = vmatprep.subr.mxu0 0.0
  %120 = vmatpush1.msra.mxu0 0.0
  %121 = vmatprep.subr.mxu0 0.0
  %122 = vmatpush1.msra.mxu0 0.0
  %123 = vmatprep.subr.mxu0 0.0
  %124 = vmatpush1.msra.mxu0 0.0
  %125 = vmatprep.subr.mxu0 0.0
  %126 = vmatpush1.msra.mxu0 0.0
  %127 = vmatprep.subr.mxu0 0.0
  %128 = vmatpush1.msra.mxu0 0.0
  %129 = vmatprep.mubr.f32.mxu0 0.0
  %130 = vmatmul.mubr.f32.gmra.mrb[0].mxu0 %v38
  %v131 = vpop.f32.mrb[0].mxu0
  %v132 = vadd.f32 %v35, %v131
  %v133 = vpop.f32.mrb[0].mxu0
  %134 = vmatprep.mubr.f32.mxu0 0.0
  %135 = vmatmul.mubr.f32.gmra.mrb[0].mxu0 %v41
  %v136 = vpop.f32.mrb[0].mxu0
  %v137 = vadd.f32 %v35, %v136
  %v138 = vpop.f32.mrb[0].mxu0
  %139 = vmatprep.mubr.f32.mxu0 0.0
  %140 = vmatmul.mubr.f32.gmra.mrb[0].mxu0 %v44
  %v141 = vpop.f32.mrb[0].mxu0
  %v142 = vadd.f32 %v35, %v141
  %v143 = vpop.f32.mrb[0].mxu0
  %144 = vmatprep.mubr.f32.mxu0 0.0
  %145 = vmatmul.mubr.f32.gmra.mrb[0].mxu0 %v47
  %v146 = vpop.f32.mrb[0].mxu0
  %v147 = vadd.f32 %v35, %v146
  %v148 = vpop.f32.mrb[0].mxu0
  %149 = vmatprep.mubr.f32.mxu0 0.0
  %150 = vmatmul.mubr.f32.gmra.mrb[0].mxu0 %v50
  %v151 = vpop.f32.mrb[0].mxu0
  %v152 = vadd.f32 %v35, %v151
  %v153 = vpop.f32.mrb[0].mxu0
  %154 = vmatprep.mubr.f32.mxu0 0.0
  %155 = vmatmul.mubr.f32.gmra.mrb[0].mxu0 %v53
  %v156 = vpop.f32.mrb[0].mxu0
  %v157 = vadd.f32 %v35, %v156
  %v158 = vpop.f32.mrb[0].mxu0
  %159 = vmatprep.mubr.f32.mxu0 0.0
  %160 = vmatmul.mubr.f32.gmra.mrb[0].mxu0 %v56
  %v161 = vpop.f32.mrb[0].mxu0
  %v162 = vadd.f32 %v35, %v161
  %v163 = vpop.f32.mrb[0].mxu0
  %164 = vmatprep.mubr.f32.mxu0 0.0
  %165 = vmatmul.mubr.f32.gmra.mrb[0].mxu0 %v59
  %v166 = vpop.f32.mrb[0].mxu0
  %v167 = vadd.f32 %v35, %v166
  %v168 = vpop.f32.mrb[0].mxu0
  %169 = vdwg.mxu0
  %v170 = vtanh.pop %v132
  %vm171 = vcmask 261120
  %v173 = vsel %vm171, %v170, 0
  %175 = vmatprep.subr.mxu0 0.0
  %176 = vmatpush1.msra.mxu0 %v11
  %177 = vmatprep.subr.mxu0 0.0
  %178 = vmatpush1.msra.mxu0 %v12
  %179 = vmatprep.subr.mxu0 0.0
  %180 = vmatpush1.msra.mxu0 %v13
  %181 = vmatprep.subr.mxu0 0.0
  %182 = vmatpush1.msra.mxu0 %v14
  %183 = vmatprep.subr.mxu0 0.0
  %184 = vmatpush1.msra.mxu0 0.0
  %185 = vmatprep.subr.mxu0 0.0
  %186 = vmatpush1.msra.mxu0 0.0
  %187 = vmatprep.subr.mxu0 0.0
  %188 = vmatpush1.msra.mxu0 0.0
  %189 = vmatprep.subr.mxu0 0.0
  %190 = vmatpush1.msra.mxu0 0.0
  %191 = vmatprep.subr.mxu0 0.0
  %192 = vmatpush1.msra.mxu0 0.0
  %193 = vmatprep.subr.mxu0 0.0
  %194 = vmatpush1.msra.mxu0 0.0
  %195 = vmatprep.subr.mxu0 0.0
  %196 = vmatpush1.msra.mxu0 0.0
  %197 = vmatprep.subr.mxu0 0.0
  %198 = vmatpush1.msra.mxu0 0.0
  %199 = vmatprep.subr.mxu0 0.0
  %200 = vmatpush1.msra.mxu0 0.0
  %201 = vmatprep.subr.mxu0 0.0
  %202 = vmatpush1.msra.mxu0 0.0
  %203 = vmatprep.subr.mxu0 0.0
  %204 = vmatpush1.msra.mxu0 0.0
  %205 = vmatprep.subr.mxu0 0.0
  %206 = vmatpush1.msra.mxu0 0.0
  %207 = vmatprep.subr.mxu0 0.0
  %208 = vmatpush1.msra.mxu0 0.0
  %209 = vmatprep.subr.mxu0 0.0
  %210 = vmatpush1.msra.mxu0 0.0
  %211 = vmatprep.subr.mxu0 0.0
  %212 = vmatpush1.msra.mxu0 0.0
  %213 = vmatprep.subr.mxu0 0.0
  %214 = vmatpush1.msra.mxu0 0.0
  %215 = vmatprep.subr.mxu0 0.0
  %216 = vmatpush1.msra.mxu0 0.0
  %217 = vmatprep.subr.mxu0 0.0
  %218 = vmatpush1.msra.mxu0 0.0
  %219 = vmatprep.subr.mxu0 0.0
  %220 = vmatpush1.msra.mxu0 0.0
  %221 = vmatprep.subr.mxu0 0.0
  %222 = vmatpush1.msra.mxu0 0.0
  %223 = vmatprep.subr.mxu0 0.0
  %224 = vmatpush1.msra.mxu0 0.0
  %225 = vmatprep.subr.mxu0 0.0
  %226 = vmatpush1.msra.mxu0 0.0
  %227 = vmatprep.subr.mxu0 0.0
  %228 = vmatpush1.msra.mxu0 0.0
  %229 = vmatprep.subr.mxu0 0.0
  %230 = vmatpush1.msra.mxu0 0.0
  %231 = vmatprep.subr.mxu0 0.0
  %232 = vmatpush1.msra.mxu0 0.0
  %233 = vmatprep.subr.mxu0 0.0
  %234 = vmatpush1.msra.mxu0 0.0
  %235 = vmatprep.subr.mxu0 0.0
  %236 = vmatpush1.msra.mxu0 0.0
  %237 = vmatprep.subr.mxu0 0.0
  %238 = vmatpush1.msra.mxu0 0.0
  %239 = vmatprep.mubr.f32.mxu0 0.0
  %240 = vmatmul.mubr.f32.gmra.mrb[0].mxu0 %v173
  %v241 = vpop.f32.mrb[0].mxu0
  %v242 = vadd.f32 0.0, %v241
  %v243 = vpop.f32.mrb[0].mxu0
  %244 = vdwg.mxu0
  %v245 = vadd.f32 %v137, %v242
  %v246 = vtanh.pop %v245
  %v248 = vsel %vm171, %v246, 0
  %250 = vmatprep.subr.mxu0 0.0
  %251 = vmatpush1.msra.mxu0 %v11
  %252 = vmatprep.subr.mxu0 0.0
  %253 = vmatpush1.msra.mxu0 %v12
  %254 = vmatprep.subr.mxu0 0.0
  %255 = vmatpush1.msra.mxu0 %v13
  %256 = vmatprep.subr.mxu0 0.0
  %257 = vmatpush1.msra.mxu0 %v14
  %258 = vmatprep.subr.mxu0 0.0
  %259 = vmatpush1.msra.mxu0 0.0
  %260 = vmatprep.subr.mxu0 0.0
  %261 = vmatpush1.msra.mxu0 0.0
  %262 = vmatprep.subr.mxu0 0.0
  %263 = vmatpush1.msra.mxu0 0.0
  %264 = vmatprep.subr.mxu0 0.0
  %265 = vmatpush1.msra.mxu0 0.0
  %266 = vmatprep.subr.mxu0 0.0
  %267 = vmatpush1.msra.mxu0 0.0
  %268 = vmatprep.subr.mxu0 0.0
  %269 = vmatpush1.msra.mxu0 0.0
  %270 = vmatprep.subr.mxu0 0.0
  %271 = vmatpush1.msra.mxu0 0.0
  %272 = vmatprep.subr.mxu0 0.0
  %273 = vmatpush1.msra.mxu0 0.0
  %274 = vmatprep.subr.mxu0 0.0
  %275 = vmatpush1.msra.mxu0 0.0
  %276 = vmatprep.subr.mxu0 0.0
  %277 = vmatpush1.msra.mxu0 0.0
  %278 = vmatprep.subr.mxu0 0.0
  %279 = vmatpush1.msra.mxu0 0.0
  %280 = vmatprep.subr.mxu0 0.0
  %281 = vmatpush1.msra.mxu0 0.0
  %282 = vmatprep.subr.mxu0 0.0
  %283 = vmatpush1.msra.mxu0 0.0
  %284 = vmatprep.subr.mxu0 0.0
  %285 = vmatpush1.msra.mxu0 0.0
  %286 = vmatprep.subr.mxu0 0.0
  %287 = vmatpush1.msra.mxu0 0.0
  %288 = vmatprep.subr.mxu0 0.0
  %289 = vmatpush1.msra.mxu0 0.0
  %290 = vmatprep.subr.mxu0 0.0
  %291 = vmatpush1.msra.mxu0 0.0
  %292 = vmatprep.subr.mxu0 0.0
  %293 = vmatpush1.msra.mxu0 0.0
  %294 = vmatprep.subr.mxu0 0.0
  %295 = vmatpush1.msra.mxu0 0.0
  %296 = vmatprep.subr.mxu0 0.0
  %297 = vmatpush1.msra.mxu0 0.0
  %298 = vmatprep.subr.mxu0 0.0
  %299 = vmatpush1.msra.mxu0 0.0
  %300 = vmatprep.subr.mxu0 0.0
  %301 = vmatpush1.msra.mxu0 0.0
  %302 = vmatprep.subr.mxu0 0.0
  %303 = vmatpush1.msra.mxu0 0.0
  %304 = vmatprep.subr.mxu0 0.0
  %305 = vmatpush1.msra.mxu0 0.0
  %306 = vmatprep.subr.mxu0 0.0
  %307 = vmatpush1.msra.mxu0 0.0
  %308 = vmatprep.subr.mxu0 0.0
  %309 = vmatpush1.msra.mxu0 0.0
  %310 = vmatprep.subr.mxu0 0.0
  %311 = vmatpush1.msra.mxu0 0.0
  %312 = vmatprep.subr.mxu0 0.0
  %313 = vmatpush1.msra.mxu0 0.0
  %314 = vmatprep.mubr.f32.mxu0 0.0
  %315 = vmatmul.mubr.f32.gmra.mrb[0].mxu0 %v248
  %v316 = vpop.f32.mrb[0].mxu0
  %v317 = vadd.f32 0.0, %v316
  %v318 = vpop.f32.mrb[0].mxu0
  %319 = vdwg.mxu0
  %v320 = vadd.f32 %v142, %v317
  %v321 = vtanh.pop %v320
  %v323 = vsel %vm171, %v321, 0
  %325 = vmatprep.subr.mxu0 0.0
  %326 = vmatpush1.msra.mxu0 %v11
  %327 = vmatprep.subr.mxu0 0.0
  %328 = vmatpush1.msra.mxu0 %v12
  %329 = vmatprep.subr.mxu0 0.0
  %330 = vmatpush1.msra.mxu0 %v13
  %331 = vmatprep.subr.mxu0 0.0
  %332 = vmatpush1.msra.mxu0 %v14
  %333 = vmatprep.subr.mxu0 0.0
  %334 = vmatpush1.msra.mxu0 0.0
  %335 = vmatprep.subr.mxu0 0.0
  %336 = vmatpush1.msra.mxu0 0.0
  %337 = vmatprep.subr.mxu0 0.0
  %338 = vmatpush1.msra.mxu0 0.0
  %339 = vmatprep.subr.mxu0 0.0
  %340 = vmatpush1.msra.mxu0 0.0
  %341 = vmatprep.subr.mxu0 0.0
  %342 = vmatpush1.msra.mxu0 0.0
  %343 = vmatprep.subr.mxu0 0.0
  %344 = vmatpush1.msra.mxu0 0.0
  %345 = vmatprep.subr.mxu0 0.0
  %346 = vmatpush1.msra.mxu0 0.0
  %347 = vmatprep.subr.mxu0 0.0
  %348 = vmatpush1.msra.mxu0 0.0
  %349 = vmatprep.subr.mxu0 0.0
  %350 = vmatpush1.msra.mxu0 0.0
  %351 = vmatprep.subr.mxu0 0.0
  %352 = vmatpush1.msra.mxu0 0.0
  %353 = vmatprep.subr.mxu0 0.0
  %354 = vmatpush1.msra.mxu0 0.0
  %355 = vmatprep.subr.mxu0 0.0
  %356 = vmatpush1.msra.mxu0 0.0
  %357 = vmatprep.subr.mxu0 0.0
  %358 = vmatpush1.msra.mxu0 0.0
  %359 = vmatprep.subr.mxu0 0.0
  %360 = vmatpush1.msra.mxu0 0.0
  %361 = vmatprep.subr.mxu0 0.0
  %362 = vmatpush1.msra.mxu0 0.0
  %363 = vmatprep.subr.mxu0 0.0
  %364 = vmatpush1.msra.mxu0 0.0
  %365 = vmatprep.subr.mxu0 0.0
  %366 = vmatpush1.msra.mxu0 0.0
  %367 = vmatprep.subr.mxu0 0.0
  %368 = vmatpush1.msra.mxu0 0.0
  %369 = vmatprep.subr.mxu0 0.0
  %370 = vmatpush1.msra.mxu0 0.0
  %371 = vmatprep.subr.mxu0 0.0
  %372 = vmatpush1.msra.mxu0 0.0
  %373 = vmatprep.subr.mxu0 0.0
  %374 = vmatpush1.msra.mxu0 0.0
  %375 = vmatprep.subr.mxu0 0.0
  %376 = vmatpush1.msra.mxu0 0.0
  %377 = vmatprep.subr.mxu0 0.0
  %378 = vmatpush1.msra.mxu0 0.0
  %379 = vmatprep.subr.mxu0 0.0
  %380 = vmatpush1.msra.mxu0 0.0
  %381 = vmatprep.subr.mxu0 0.0
  %382 = vmatpush1.msra.mxu0 0.0
  %383 = vmatprep.subr.mxu0 0.0
  %384 = vmatpush1.msra.mxu0 0.0
  %385 = vmatprep.subr.mxu0 0.0
  %386 = vmatpush1.msra.mxu0 0.0
  %387 = vmatprep.subr.mxu0 0.0
  %388 = vmatpush1.msra.mxu0 0.0
  %389 = vmatprep.mubr.f32.mxu0 0.0
  %390 = vmatmul.mubr.f32.gmra.mrb[0].mxu0 %v323
  %v391 = vpop.f32.mrb[0].mxu0
  %v392 = vadd.f32 0.0, %v391
  %v393 = vpop.f32.mrb[0].mxu0
  %394 = vdwg.mxu0
  %v395 = vadd.f32 %v147, %v392
  %v396 = vtanh.pop %v395
  %v398 = vsel %vm171, %v396, 0
  %400 = vmatprep.subr.mxu0 0.0
  %401 = vmatpush1.msra.mxu0 %v11
  %402 = vmatprep.subr.mxu0 0.0
  %403 = vmatpush1.msra.mxu0 %v12
  %404 = vmatprep.subr.mxu0 0.0
  %405 = vmatpush1.msra.mxu0 %v13
  %406 = vmatprep.subr.mxu0 0.0
  %407 = vmatpush1.msra.mxu0 %v14
  %408 = vmatprep.subr.mxu0 0.0
  %409 = vmatpush1.msra.mxu0 0.0
  %410 = vmatprep.subr.mxu0 0.0
  %411 = vmatpush1.msra.mxu0 0.0
  %412 = vmatprep.subr.mxu0 0.0
  %413 = vmatpush1.msra.mxu0 0.0
  %414 = vmatprep.subr.mxu0 0.0
  %415 = vmatpush1.msra.mxu0 0.0
  %416 = vmatprep.subr.mxu0 0.0
  %417 = vmatpush1.msra.mxu0 0.0
  %418 = vmatprep.subr.mxu0 0.0
  %419 = vmatpush1.msra.mxu0 0.0
  %420 = vmatprep.subr.mxu0 0.0
  %421 = vmatpush1.msra.mxu0 0.0
  %422 = vmatprep.subr.mxu0 0.0
  %423 = vmatpush1.msra.mxu0 0.0
  %424 = vmatprep.subr.mxu0 0.0
  %425 = vmatpush1.msra.mxu0 0.0
  %426 = vmatprep.subr.mxu0 0.0
  %427 = vmatpush1.msra.mxu0 0.0
  %428 = vmatprep.subr.mxu0 0.0
  %429 = vmatpush1.msra.mxu0 0.0
  %430 = vmatprep.subr.mxu0 0.0
  %431 = vmatpush1.msra.mxu0 0.0
  %432 = vmatprep.subr.mxu0 0.0
  %433 = vmatpush1.msra.mxu0 0.0
  %434 = vmatprep.subr.mxu0 0.0
  %435 = vmatpush1.msra.mxu0 0.0
  %436 = vmatprep.subr.mxu0 0.0
  %437 = vmatpush1.msra.mxu0 0.0
  %438 = vmatprep.subr.mxu0 0.0
  %439 = vmatpush1.msra.mxu0 0.0
  %440 = vmatprep.subr.mxu0 0.0
  %441 = vmatpush1.msra.mxu0 0.0
  %442 = vmatprep.subr.mxu0 0.0
  %443 = vmatpush1.msra.mxu0 0.0
  %444 = vmatprep.subr.mxu0 0.0
  %445 = vmatpush1.msra.mxu0 0.0
  %446 = vmatprep.subr.mxu0 0.0
  %447 = vmatpush1.msra.mxu0 0.0
  %448 = vmatprep.subr.mxu0 0.0
  %449 = vmatpush1.msra.mxu0 0.0
  %450 = vmatprep.subr.mxu0 0.0
  %451 = vmatpush1.msra.mxu0 0.0
  %452 = vmatprep.subr.mxu0 0.0
  %453 = vmatpush1.msra.mxu0 0.0
  %454 = vmatprep.subr.mxu0 0.0
  %455 = vmatpush1.msra.mxu0 0.0
  %456 = vmatprep.subr.mxu0 0.0
  %457 = vmatpush1.msra.mxu0 0.0
  %458 = vmatprep.subr.mxu0 0.0
  %459 = vmatpush1.msra.mxu0 0.0
  %460 = vmatprep.subr.mxu0 0.0
  %461 = vmatpush1.msra.mxu0 0.0
  %462 = vmatprep.subr.mxu0 0.0
  %463 = vmatpush1.msra.mxu0 0.0
  %464 = vmatprep.mubr.f32.mxu0 0.0
  %465 = vmatmul.mubr.f32.gmra.mrb[0].mxu0 %v398
  %v466 = vpop.f32.mrb[0].mxu0
  %v467 = vadd.f32 0.0, %v466
  %v468 = vpop.f32.mrb[0].mxu0
  %469 = vdwg.mxu0
  %v470 = vadd.f32 %v152, %v467
  %v471 = vtanh.pop %v470
  %v473 = vsel %vm171, %v471, 0
  %475 = vmatprep.subr.mxu0 0.0
  %476 = vmatpush1.msra.mxu0 %v11
  %477 = vmatprep.subr.mxu0 0.0
  %478 = vmatpush1.msra.mxu0 %v12
  %479 = vmatprep.subr.mxu0 0.0
  %480 = vmatpush1.msra.mxu0 %v13
  %481 = vmatprep.subr.mxu0 0.0
  %482 = vmatpush1.msra.mxu0 %v14
  %483 = vmatprep.subr.mxu0 0.0
  %484 = vmatpush1.msra.mxu0 0.0
  %485 = vmatprep.subr.mxu0 0.0
  %486 = vmatpush1.msra.mxu0 0.0
  %487 = vmatprep.subr.mxu0 0.0
  %488 = vmatpush1.msra.mxu0 0.0
  %489 = vmatprep.subr.mxu0 0.0
  %490 = vmatpush1.msra.mxu0 0.0
  %491 = vmatprep.subr.mxu0 0.0
  %492 = vmatpush1.msra.mxu0 0.0
  %493 = vmatprep.subr.mxu0 0.0
  %494 = vmatpush1.msra.mxu0 0.0
  %495 = vmatprep.subr.mxu0 0.0
  %496 = vmatpush1.msra.mxu0 0.0
  %497 = vmatprep.subr.mxu0 0.0
  %498 = vmatpush1.msra.mxu0 0.0
  %499 = vmatprep.subr.mxu0 0.0
  %500 = vmatpush1.msra.mxu0 0.0
  %501 = vmatprep.subr.mxu0 0.0
  %502 = vmatpush1.msra.mxu0 0.0
  %503 = vmatprep.subr.mxu0 0.0
  %504 = vmatpush1.msra.mxu0 0.0
  %505 = vmatprep.subr.mxu0 0.0
  %506 = vmatpush1.msra.mxu0 0.0
  %507 = vmatprep.subr.mxu0 0.0
  %508 = vmatpush1.msra.mxu0 0.0
  %509 = vmatprep.subr.mxu0 0.0
  %510 = vmatpush1.msra.mxu0 0.0
  %511 = vmatprep.subr.mxu0 0.0
  %512 = vmatpush1.msra.mxu0 0.0
  %513 = vmatprep.subr.mxu0 0.0
  %514 = vmatpush1.msra.mxu0 0.0
  %515 = vmatprep.subr.mxu0 0.0
  %516 = vmatpush1.msra.mxu0 0.0
  %517 = vmatprep.subr.mxu0 0.0
  %518 = vmatpush1.msra.mxu0 0.0
  %519 = vmatprep.subr.mxu0 0.0
  %520 = vmatpush1.msra.mxu0 0.0
  %521 = vmatprep.subr.mxu0 0.0
  %522 = vmatpush1.msra.mxu0 0.0
  %523 = vmatprep.subr.mxu0 0.0
  %524 = vmatpush1.msra.mxu0 0.0
  %525 = vmatprep.subr.mxu0 0.0
  %526 = vmatpush1.msra.mxu0 0.0
  %527 = vmatprep.subr.mxu0 0.0
  %528 = vmatpush1.msra.mxu0 0.0
  %529 = vmatprep.subr.mxu0 0.0
  %530 = vmatpush1.msra.mxu0 0.0
  %531 = vmatprep.subr.mxu0 0.0
  %532 = vmatpush1.msra.mxu0 0.0
  %533 = vmatprep.subr.mxu0 0.0
  %534 = vmatpush1.msra.mxu0 0.0
  %535 = vmatprep.subr.mxu0 0.0
  %536 = vmatpush1.msra.mxu0 0.0
  %537 = vmatprep.subr.mxu0 0.0
  %538 = vmatpush1.msra.mxu0 0.0
  %539 = vmatprep.mubr.f32.mxu0 0.0
  %540 = vmatmul.mubr.f32.gmra.mrb[0].mxu0 %v473
  %v541 = vpop.f32.mrb[0].mxu0
  %v542 = vadd.f32 0.0, %v541
  %v543 = vpop.f32.mrb[0].mxu0
  %544 = vdwg.mxu0
  %v545 = vadd.f32 %v157, %v542
  %v546 = vtanh.pop %v545
  %v548 = vsel %vm171, %v546, 0
  %550 = vmatprep.subr.mxu0 0.0
  %551 = vmatpush1.msra.mxu0 %v11
  %552 = vmatprep.subr.mxu0 0.0
  %553 = vmatpush1.msra.mxu0 %v12
  %554 = vmatprep.subr.mxu0 0.0
  %555 = vmatpush1.msra.mxu0 %v13
  %556 = vmatprep.subr.mxu0 0.0
  %557 = vmatpush1.msra.mxu0 %v14
  %558 = vmatprep.subr.mxu0 0.0
  %559 = vmatpush1.msra.mxu0 0.0
  %560 = vmatprep.subr.mxu0 0.0
  %561 = vmatpush1.msra.mxu0 0.0
  %562 = vmatprep.subr.mxu0 0.0
  %563 = vmatpush1.msra.mxu0 0.0
  %564 = vmatprep.subr.mxu0 0.0
  %565 = vmatpush1.msra.mxu0 0.0
  %566 = vmatprep.subr.mxu0 0.0
  %567 = vmatpush1.msra.mxu0 0.0
  %568 = vmatprep.subr.mxu0 0.0
  %569 = vmatpush1.msra.mxu0 0.0
  %570 = vmatprep.subr.mxu0 0.0
  %571 = vmatpush1.msra.mxu0 0.0
  %572 = vmatprep.subr.mxu0 0.0
  %573 = vmatpush1.msra.mxu0 0.0
  %574 = vmatprep.subr.mxu0 0.0
  %575 = vmatpush1.msra.mxu0 0.0
  %576 = vmatprep.subr.mxu0 0.0
  %577 = vmatpush1.msra.mxu0 0.0
  %578 = vmatprep.subr.mxu0 0.0
  %579 = vmatpush1.msra.mxu0 0.0
  %580 = vmatprep.subr.mxu0 0.0
  %581 = vmatpush1.msra.mxu0 0.0
  %582 = vmatprep.subr.mxu0 0.0
  %583 = vmatpush1.msra.mxu0 0.0
  %584 = vmatprep.subr.mxu0 0.0
  %585 = vmatpush1.msra.mxu0 0.0
  %586 = vmatprep.subr.mxu0 0.0
  %587 = vmatpush1.msra.mxu0 0.0
  %588 = vmatprep.subr.mxu0 0.0
  %589 = vmatpush1.msra.mxu0 0.0
  %590 = vmatprep.subr.mxu0 0.0
  %591 = vmatpush1.msra.mxu0 0.0
  %592 = vmatprep.subr.mxu0 0.0
  %593 = vmatpush1.msra.mxu0 0.0
  %594 = vmatprep.subr.mxu0 0.0
  %595 = vmatpush1.msra.mxu0 0.0
  %596 = vmatprep.subr.mxu0 0.0
  %597 = vmatpush1.msra.mxu0 0.0
  %598 = vmatprep.subr.mxu0 0.0
  %599 = vmatpush1.msra.mxu0 0.0
  %600 = vmatprep.subr.mxu0 0.0
  %601 = vmatpush1.msra.mxu0 0.0
  %602 = vmatprep.subr.mxu0 0.0
  %603 = vmatpush1.msra.mxu0 0.0
  %604 = vmatprep.subr.mxu0 0.0
  %605 = vmatpush1.msra.mxu0 0.0
  %606 = vmatprep.subr.mxu0 0.0
  %607 = vmatpush1.msra.mxu0 0.0
  %608 = vmatprep.subr.mxu0 0.0
  %609 = vmatpush1.msra.mxu0 0.0
  %610 = vmatprep.subr.mxu0 0.0
  %611 = vmatpush1.msra.mxu0 0.0
  %612 = vmatprep.subr.mxu0 0.0
  %613 = vmatpush1.msra.mxu0 0.0
  %614 = vmatprep.mubr.f32.mxu0 0.0
  %615 = vmatmul.mubr.f32.gmra.mrb[0].mxu0 %v548
  %v616 = vpop.f32.mrb[0].mxu0
  %v617 = vadd.f32 0.0, %v616
  %v618 = vpop.f32.mrb[0].mxu0
  %619 = vdwg.mxu0
  %v620 = vadd.f32 %v162, %v617
  %v621 = vtanh.pop %v620
  %v623 = vsel %vm171, %v621, 0
  %625 = vmatprep.subr.mxu0 0.0
  %626 = vmatpush1.msra.mxu0 %v11
  %627 = vmatprep.subr.mxu0 0.0
  %628 = vmatpush1.msra.mxu0 %v12
  %629 = vmatprep.subr.mxu0 0.0
  %630 = vmatpush1.msra.mxu0 %v13
  %631 = vmatprep.subr.mxu0 0.0
  %632 = vmatpush1.msra.mxu0 %v14
  %633 = vmatprep.subr.mxu0 0.0
  %634 = vmatpush1.msra.mxu0 0.0
  %635 = vmatprep.subr.mxu0 0.0
  %636 = vmatpush1.msra.mxu0 0.0
  %637 = vmatprep.subr.mxu0 0.0
  %638 = vmatpush1.msra.mxu0 0.0
  %639 = vmatprep.subr.mxu0 0.0
  %640 = vmatpush1.msra.mxu0 0.0
  %641 = vmatprep.subr.mxu0 0.0
  %642 = vmatpush1.msra.mxu0 0.0
  %643 = vmatprep.subr.mxu0 0.0
  %644 = vmatpush1.msra.mxu0 0.0
  %645 = vmatprep.subr.mxu0 0.0
  %646 = vmatpush1.msra.mxu0 0.0
  %647 = vmatprep.subr.mxu0 0.0
  %648 = vmatpush1.msra.mxu0 0.0
  %649 = vmatprep.subr.mxu0 0.0
  %650 = vmatpush1.msra.mxu0 0.0
  %651 = vmatprep.subr.mxu0 0.0
  %652 = vmatpush1.msra.mxu0 0.0
  %653 = vmatprep.subr.mxu0 0.0
  %654 = vmatpush1.msra.mxu0 0.0
  %655 = vmatprep.subr.mxu0 0.0
  %656 = vmatpush1.msra.mxu0 0.0
  %657 = vmatprep.subr.mxu0 0.0
  %658 = vmatpush1.msra.mxu0 0.0
  %659 = vmatprep.subr.mxu0 0.0
  %660 = vmatpush1.msra.mxu0 0.0
  %661 = vmatprep.subr.mxu0 0.0
  %662 = vmatpush1.msra.mxu0 0.0
  %663 = vmatprep.subr.mxu0 0.0
  %664 = vmatpush1.msra.mxu0 0.0
  %665 = vmatprep.subr.mxu0 0.0
  %666 = vmatpush1.msra.mxu0 0.0
  %667 = vmatprep.subr.mxu0 0.0
  %668 = vmatpush1.msra.mxu0 0.0
  %669 = vmatprep.subr.mxu0 0.0
  %670 = vmatpush1.msra.mxu0 0.0
  %671 = vmatprep.subr.mxu0 0.0
  %672 = vmatpush1.msra.mxu0 0.0
  %673 = vmatprep.subr.mxu0 0.0
  %674 = vmatpush1.msra.mxu0 0.0
  %675 = vmatprep.subr.mxu0 0.0
  %676 = vmatpush1.msra.mxu0 0.0
  %677 = vmatprep.subr.mxu0 0.0
  %678 = vmatpush1.msra.mxu0 0.0
  %679 = vmatprep.subr.mxu0 0.0
  %680 = vmatpush1.msra.mxu0 0.0
  %681 = vmatprep.subr.mxu0 0.0
  %682 = vmatpush1.msra.mxu0 0.0
  %683 = vmatprep.subr.mxu0 0.0
  %684 = vmatpush1.msra.mxu0 0.0
  %685 = vmatprep.subr.mxu0 0.0
  %686 = vmatpush1.msra.mxu0 0.0
  %687 = vmatprep.subr.mxu0 0.0
  %688 = vmatpush1.msra.mxu0 0.0
  %689 = vmatprep.mubr.f32.mxu0 0.0
  %690 = vmatmul.mubr.f32.gmra.mrb[0].mxu0 %v623
  %v691 = vpop.f32.mrb[0].mxu0
  %v692 = vadd.f32 0.0, %v691
  %v693 = vpop.f32.mrb[0].mxu0
  %694 = vdwg.mxu0
  %v695 = vadd.f32 %v167, %v692
  %v696 = vtanh.pop %v695
  %v697 = vlaneseq
  %v698 = vshrl.u32 %v697, 7
  %v699 = vsub.s32 0, %v698
  %v700 = vrot.slane %v21, %v699
  %v702 = vsel %vm171, %v696, 0
  %704 = vmatprep.subr.mxu0 0.0
  %705 = vmatpush1.msra.mxu0 %v17
  %706 = vmatprep.subr.mxu0 0.0
  %707 = vmatpush1.msra.mxu0 %v18
  %708 = vmatprep.subr.mxu0 0.0
  %709 = vmatpush1.msra.mxu0 %v19
  %710 = vmatprep.subr.mxu0 0.0
  %711 = vmatpush1.msra.mxu0 %v20
  %712 = vmatprep.subr.mxu0 0.0
  %713 = vmatpush1.msra.mxu0 0.0
  %714 = vmatprep.subr.mxu0 0.0
  %715 = vmatpush1.msra.mxu0 0.0
  %716 = vmatprep.subr.mxu0 0.0
  %717 = vmatpush1.msra.mxu0 0.0
  %718 = vmatprep.subr.mxu0 0.0
  %719 = vmatpush1.msra.mxu0 0.0
  %720 = vmatprep.subr.mxu0 0.0
  %721 = vmatpush1.msra.mxu0 0.0
  %722 = vmatprep.subr.mxu0 0.0
  %723 = vmatpush1.msra.mxu0 0.0
  %724 = vmatprep.subr.mxu0 0.0
  %725 = vmatpush1.msra.mxu0 0.0
  %726 = vmatprep.subr.mxu0 0.0
  %727 = vmatpush1.msra.mxu0 0.0
  %728 = vmatprep.subr.mxu0 0.0
  %729 = vmatpush1.msra.mxu0 0.0
  %730 = vmatprep.subr.mxu0 0.0
  %731 = vmatpush1.msra.mxu0 0.0
  %732 = vmatprep.subr.mxu0 0.0
  %733 = vmatpush1.msra.mxu0 0.0
  %734 = vmatprep.subr.mxu0 0.0
  %735 = vmatpush1.msra.mxu0 0.0
  %736 = vmatprep.subr.mxu0 0.0
  %737 = vmatpush1.msra.mxu0 0.0
  %738 = vmatprep.subr.mxu0 0.0
  %739 = vmatpush1.msra.mxu0 0.0
  %740 = vmatprep.subr.mxu0 0.0
  %741 = vmatpush1.msra.mxu0 0.0
  %742 = vmatprep.subr.mxu0 0.0
  %743 = vmatpush1.msra.mxu0 0.0
  %744 = vmatprep.subr.mxu0 0.0
  %745 = vmatpush1.msra.mxu0 0.0
  %746 = vmatprep.subr.mxu0 0.0
  %747 = vmatpush1.msra.mxu0 0.0
  %748 = vmatprep.subr.mxu0 0.0
  %749 = vmatpush1.msra.mxu0 0.0
  %750 = vmatprep.subr.mxu0 0.0
  %751 = vmatpush1.msra.mxu0 0.0
  %752 = vmatprep.subr.mxu0 0.0
  %753 = vmatpush1.msra.mxu0 0.0
  %754 = vmatprep.subr.mxu0 0.0
  %755 = vmatpush1.msra.mxu0 0.0
  %756 = vmatprep.subr.mxu0 0.0
  %757 = vmatpush1.msra.mxu0 0.0
  %758 = vmatprep.subr.mxu0 0.0
  %759 = vmatpush1.msra.mxu0 0.0
  %760 = vmatprep.subr.mxu0 0.0
  %761 = vmatpush1.msra.mxu0 0.0
  %762 = vmatprep.subr.mxu0 0.0
  %763 = vmatpush1.msra.mxu0 0.0
  %764 = vmatprep.subr.mxu0 0.0
  %765 = vmatpush1.msra.mxu0 0.0
  %766 = vmatprep.subr.mxu0 0.0
  %767 = vmatpush1.msra.mxu0 0.0
  %768 = vmatprep.mubr.f32.mxu0 0.0
  %769 = vmatmul.mubr.f32.gmra.mrb[0].mxu0 %v702
  %v770 = vpop.f32.mrb[0].mxu0
  %v771 = vadd.f32 %v700, %v770
  %v772 = vpop.f32.mrb[0].mxu0
  %773 = vdwg.mxu0
  %v774 = vtanh.pop %v771
  %v775 = vlaneseq
  %v776 = vshrl.u32 %v775, 7
  %v777 = vsub.s32 0, %v776
  %v778 = vrot.slane %v22, %v777
  %v779 = vmul.f32 %v774, %v778
  %v780 = vsel %vm171, %v779, 0.0
  %781 = vadd.xlane.f32.xlu0 %v780
  %v782 = vpop.xlane.xlu0 %781
  %v783 = vlaneseq
  %v784 = vshrl.u32 %v783, 7
  %v785 = vsub.s32 0, %v784
  %v786 = vrot.slane %v23, %v785
  %v787 = vadd.f32 %v782, %v786
  %vm788 = vcmask 1024
  %789 = vst.msk [vmem:[%s2] sm:$0x3] %vm788, %v787
  // Predicated region
  $region10: #{simple_rnn_forward.1} parent=0 // pred_check
    _
  $region11: #{simple_rnn_forward.1} parent=0 // pred_check_branch
    %791 = sbr.rel (0) target = $region13
  $region12: #{simple_rnn_forward.1} parent=0 // pred_region
    _
  $region13: #{simple_rnn_forward.1} parent=0 // pred_fallthru
    _
  // Predicated region
  $region14: #{simple_rnn_forward.1} parent=0 // pred_check
    _
  $region15: #{simple_rnn_forward.1} parent=0 // pred_check_branch
    %793 = sbr.rel (0) target = $region17
  $region16: #{simple_rnn_forward.1} parent=0 // pred_region
    _
  $region17: #{simple_rnn_forward.1} parent=0 // pred_fallthru
    _

</llo_original>
